<compile_context>
chip_gen: v5e
topology: v5e:2x2
jax: 0.10.0
libtpu: 0.0.40
codegen_flags: <defaults>
</compile_context>

<pallas_src>
import numpy as np
import jax
import jax.numpy as jnp
from jax.experimental import pallas as pl
from jax.experimental.pallas import tpu as pltpu


# --------------------------------------------------------------------------
# Kernel 1: masked mean-pooling over L + L2-normalize of the text features.
#
# Grid (B/TB, L/TL); batch axis "parallel" (megacore shard on v7x), L axis
# "arbitrary" (reduction).  The output block is pinned across L (its
# index_map ignores l), so it is the f32 accumulator — no separate scratch.
# --------------------------------------------------------------------------
def text_pool_kernel(tok_ref, mask_ref, out_ref):
    l = pl.program_id(1)

    @pl.when(l == 0)
    def _():
        out_ref[...] = jnp.zeros_like(out_ref)

    tok = tok_ref[...]                               # (TB, TL, D), native dtype
    mask = mask_ref[...].astype(tok.dtype)           # (TB, TL), 0/1

    # Masked sum over L as a batched (1,TL)x(TL,D) MXU contraction with f32
    # accumulation — never materializes a (TB, TL, D) mask broadcast and
    # keeps the big tensor in its native (possibly bf16) dtype.
    pooled = jnp.einsum('bql,bld->bqd', mask[:, None, :], tok,
                        preferred_element_type=jnp.float32)[:, 0, :]  # (TB, D)
    out_ref[...] += pooled

    @pl.when(l == pl.num_programs(1) - 1)
    def _():
        acc = out_ref[...]
        # mean_pooling's divide-by-count cancels under the L2 norm that
        # follows; the eps keeps all-padding rows finite (0 instead of NaN).
        inv_norm = jax.lax.rsqrt(
            jnp.sum(acc * acc, axis=1, keepdims=True) + 1e-12)        # EUP
        out_ref[...] = acc * inv_norm


# --------------------------------------------------------------------------
# Kernel 2: normalize graph feats, fold exp(logit_scale) in, similarity.
# --------------------------------------------------------------------------
def logits_kernel(scale_ref, g_ref, t_ref, out_ref):
    g = g_ref[...].astype(jnp.float32)                                # (B, D)
    t = t_ref[...]                                                    # (B, D), L2-normalized
    sq = jnp.sum(g * g, axis=1, keepdims=True)                        # (B, 1)
    # exp(logit_scale) computed exactly once (scalar), folded into the
    # per-row graph normalizer — no (B,B) elementwise scale pass.
    s = jnp.exp(scale_ref[0])
    g = g * (jax.lax.rsqrt(sq + 1e-12) * s)
    # logits_per_graph = (scaled, normalized g) @ t^T — contract D directly,
    # no in-kernel transpose of t.
    out_ref[...] = jax.lax.dot_general(
        g, t,
        dimension_numbers=(((1,), (1,)), ((), ())),
        preferred_element_type=jnp.float32)


# --------------------------------------------------------------------------
# Tiling / VMEM planning.
# --------------------------------------------------------------------------
def _vmem_capacity_bytes():
    try:
        return int(pltpu.get_tpu_info().vmem_capacity_bytes)
    except Exception:
        return 64 * 1024 * 1024   # conservative default (v7x per-TensorCore)


def _divisor_tiles(total, align, limit=None):
    """Divisors of `total` that are multiples of `align`, descending."""
    out = []
    t = align
    while t <= total:
        if total % t == 0 and (limit is None or t <= limit):
            out.append(t)
        t += align
    out.sort(reverse=True)
    return out


def _plan_text_pool(B, L, D, tok_dtype, mask_dtype):
    """Pick (TB, TL) and an explicit vmem_limit_bytes.

    Accounts for double buffering of every block:
      resident = 2*(TB,TL,D) tokens + 2*(TB,TL) mask + 2*(TB,D) f32 output.
    """
    cap = _vmem_capacity_bytes()
    tok_isz = jnp.dtype(tok_dtype).itemsize
    mask_isz = jnp.dtype(mask_dtype).itemsize
    out_isz = 4

    # Resident target: <= ~60% of physical VMEM and <= 48 MiB (leaves
    # headroom for internal scratch; re-derives automatically for v7x 64 MiB).
    budget = min(48 * 1024 * 1024, (cap * 3) // 5)

    def resident(tb, tl):
        return (2 * tb * tl * D * tok_isz      # token input, double-buffered
                + 2 * tb * tl * mask_isz       # mask input, double-buffered
                + 2 * tb * D * out_isz)        # pooled/normalized output

    tb_all = _divisor_tiles(B, 8, limit=256) or [B]
    # Prefer >= 2 batch tiles so the "parallel" axis can shard across the two
    # TensorCores of a v7x chip; per-step overhead is negligible elsewhere.
    tb_pref = [t for t in tb_all if t <= B // 2] or tb_all

    tl_all = _divisor_tiles(L, 128)
    if L not in tl_all:
        tl_all = [L] + tl_all                  # full-L block is always legal

    chosen = None
    for tb in tb_pref:
        fitting = [tl for tl in tl_all if resident(tb, tl) <= budget]
        if fitting:
            chosen = (tb, max(fitting))
            break
    if chosen is None:
        # Nothing fits the soft budget: smallest legal tiles, explicit limit
        # below covers the footprint.
        chosen = (min(tb_all), min(tl_all))

    tb, tl = chosen
    res = resident(tb, tl)
    vmem_limit = max(32 << 20, res + res // 2 + (4 << 20))
    vmem_limit = min(vmem_limit, max(cap - (8 << 20), res + (1 << 20)))
    return tb, tl, int(vmem_limit)


# --------------------------------------------------------------------------
# Wrapper.
# --------------------------------------------------------------------------
def graphclip_forward(graph_feats, text_last_hidden, attention_mask, logit_scale):
    """graph_feats: (B, D), text_last_hidden: (B, L, D), attention_mask:
    (B, L) int32, logit_scale: (1,) f32 (raw, pre-exp).  Inputs may be bf16;
    accumulation is always f32 inside the kernels."""
    B, L, D = text_last_hidden.shape
    TB, TL, vmem_limit = _plan_text_pool(
        B, L, D, text_last_hidden.dtype, attention_mask.dtype)
    grid = (B // TB, L // TL)

    # --- text mean-pool + normalize (pipelined over batch and L tiles) ---
    # NOTE: if profiling ever shows exposed DMA at L-step boundaries (small
    # forced TL), add pipeline_mode=pl.Buffered(3) to the token BlockSpec and
    # re-check the VMEM accounting above.
    text_feats = pl.pallas_call(
        text_pool_kernel,
        out_shape=jax.ShapeDtypeStruct((B, D), jnp.float32),
        grid_spec=pltpu.PrefetchScalarGridSpec(
            num_scalar_prefetch=0,
            grid=grid,
            in_specs=[
                pl.BlockSpec((TB, TL, D), lambda b, l: (b, l, 0)),
                pl.BlockSpec((TB, TL), lambda b, l: (b, l)),
            ],
            out_specs=pl.BlockSpec((TB, D), lambda b, l: (b, 0)),
        ),
        compiler_params=pltpu.CompilerParams(
            dimension_semantics=("parallel", "arbitrary"),
            vmem_limit_bytes=vmem_limit),
    )(text_last_hidden, attention_mask)

    # --- graph normalize + scaled similarity (small (B,B) matmul) ---
    # TODO(synk): for large contrastive batches, pad B to a multiple of 128
    # and tile the (B,B) output with a grid + VMEM accumulator (lane-dense
    # stores, fits v7x's 64 MiB); a single block is right at these sizes.
    logits_per_graph = pl.pallas_call(
        logits_kernel,
        out_shape=jax.ShapeDtypeStruct((B, B), jnp.float32),
        in_specs=[
            pl.BlockSpec(memory_space=pltpu.MemorySpace.SMEM),   # logit_scale
            pl.BlockSpec(memory_space=pltpu.MemorySpace.VMEM),   # graph feats
            pl.BlockSpec(memory_space=pltpu.MemorySpace.VMEM),   # text feats
        ],
        out_specs=pl.BlockSpec(memory_space=pltpu.MemorySpace.VMEM),
    )(logit_scale, graph_feats, text_feats)

    # Tiny transpose: done by XLA outside the kernel (saves an XLU transpose
    # and a second (B,B) output DMA in-kernel).
    logits_per_text = logits_per_graph.T
    return logits_per_graph, logits_per_text


def _reference(graph_feats, text_last_hidden, attention_mask, logit_scale):
    mask = attention_mask.astype(jnp.float32)[:, :, None]
    text_feats = jnp.sum(
        text_last_hidden.astype(jnp.float32) * mask, axis=1) / jnp.maximum(
            jnp.sum(mask, axis=1), 1e-9)
    g = graph_feats.astype(jnp.float32)
    g = g / jnp.linalg.norm(g, axis=1, keepdims=True)
    t = text_feats / jnp.linalg.norm(text_feats, axis=1, keepdims=True)
    logits = jnp.exp(logit_scale[0]) * (g @ t.T)
    return logits, logits.T


if __name__ == "__main__":
    # Small, deterministic shapes.
    B, L, D = 8, 16, 128

    key = jax.random.PRNGKey(0)
    k_g, k_t, k_m = jax.random.split(key, 3)

    # TODO(synk): GPS graph encoder (message passing over edge_index / pe /
    # root_n_index) has no clean Pallas equivalent here; its output embedding
    # is synthesized deterministically instead.
    graph_feats = jax.random.normal(k_g, (B, D), dtype=jnp.float32)

    # TODO(synk): HuggingFace AutoModel text transformer (pretrained
    # checkpoint) is not reproduced; its last_hidden_state is synthesized
    # deterministically.
    text_last_hidden = jax.random.normal(k_t, (B, L, D), dtype=jnp.float32)

    # Attention mask: first `valid` tokens are real, rest padding.
    valid = 4 + (jax.random.randint(k_m, (B,), 0, L - 4))
    attention_mask = (jnp.arange(L)[None, :] < valid[:, None]).astype(jnp.int32)

    # logit_scale parameter, initialized exactly as in the module.
    logit_scale = jnp.full((1,), np.log(1.0 / 0.07), dtype=jnp.float32)

    logits_per_graph, logits_per_text = graphclip_forward(
        graph_feats, text_last_hidden, attention_mask, logit_scale)
    jax.block_until_ready((logits_per_graph, logits_per_text))

    ref_g, ref_t = _reference(graph_feats, text_last_hidden, attention_mask,
                              logit_scale)
    assert logits_per_graph.shape == (B, B)
    assert logits_per_text.shape == (B, B)
    np.testing.assert_allclose(np.asarray(logits_per_graph), np.asarray(ref_g),
                               rtol=1e-4, atol=1e-4)
    np.testing.assert_allclose(np.asarray(logits_per_text), np.asarray(ref_t),
                               rtol=1e-4, atol=1e-4)
    print("KERNEL_OK")
</pallas_src>

<mosaic_0001>
module attributes {stable_mosaic.version = 11 : i64} {
  func.func @text_pool_kernel(%arg0: i32, %arg1: i32, %arg2: memref<8x16x128xf32, #tpu.memory_space<vmem>>, %arg3: memref<8x16xi32, #tpu.memory_space<vmem>>, %arg4: memref<8x128xf32, #tpu.memory_space<vmem>>) attributes {dimension_semantics = [#tpu.dimension_semantics<parallel>, #tpu.dimension_semantics<arbitrary>], iteration_bounds = array<i64: 1, 1>, scalar_prefetch = 0 : i64, scratch_operands = 0 : i64, tpu.core_type = #tpu.core_type<tc>, window_params = [{transform_indices = @transform_0, window_bounds = array<i64: 8, 16, 128>}, {transform_indices = @transform_1, window_bounds = array<i64: 8, 16>}, {transform_indices = @transform_2, window_bounds = array<i64: 8, 128>}]} {
    %c0_i32 = arith.constant 0 : i32
    %0 = arith.cmpi eq, %arg1, %c0_i32 : i32
    %1 = arith.extui %0 : i1 to i32
    %c0_i32_0 = arith.constant 0 : i32
    %2 = arith.cmpi ne, %1, %c0_i32_0 : i32
    scf.if %2 {
      %cst_11 = arith.constant 0.000000e+00 : f32
      %15 = vector.broadcast %cst_11 : f32 to vector<8x128xf32>
      %c0_12 = arith.constant 0 : index
      %c0_13 = arith.constant 0 : index
      %16 = vector.load %arg4[%c0_12, %c0_13] : memref<8x128xf32, #tpu.memory_space<vmem>>, vector<8x128xf32>
      tpu.vector_store %arg4[%c0_12, %c0_13], %15 {strides = array<i32>} : memref<8x128xf32, #tpu.memory_space<vmem>>, vector<8x128xf32>,
    } else {
    }
    %c0 = arith.constant 0 : index
    %c0_1 = arith.constant 0 : index
    %c0_2 = arith.constant 0 : index
    %3 = vector.load %arg2[%c0, %c0_1, %c0_2] : memref<8x16x128xf32, #tpu.memory_space<vmem>>, vector<8x16x128xf32>
    %c0_3 = arith.constant 0 : index
    %c0_4 = arith.constant 0 : index
    %4 = vector.load %arg3[%c0_3, %c0_4] : memref<8x16xi32, #tpu.memory_space<vmem>>, vector<8x16xi32>
    %5 = arith.sitofp %4 : vector<8x16xi32> to vector<8x16xf32>
    %6 = vector.shape_cast %5 : vector<8x16xf32> to vector<8x1x16xf32>
    "tpu.trace_start"() <{level = 10 : i32, message = "bql,bld->bqd"}> : () -> ()
    %cst = arith.constant dense<0.000000e+00> : vector<8x1x128xf32>
    %7 = tpu.matmul %6, %3, %cst {dimension_numbers = #tpu.dot_dimension_numbers<[2], [1], [1], [2], [0, 0, 0, 1, 1, 2], [0], [0]>} : vector<8x1x16xf32>, vector<8x16x128xf32>, vector<8x1x128xf32> -> vector<8x1x128xf32>
    "tpu.trace_stop"() : () -> ()
    %8 = vector.shape_cast %7 : vector<8x1x128xf32> to vector<8x128xf32>
    %c0_5 = arith.constant 0 : index
    %c0_6 = arith.constant 0 : index
    %9 = vector.load %arg4[%c0_5, %c0_6] : memref<8x128xf32, #tpu.memory_space<vmem>>, vector<8x128xf32>
    %10 = arith.addf %9, %8 : vector<8x128xf32>
    %c0_7 = arith.constant 0 : index
    %c0_8 = arith.constant 0 : index
    %11 = vector.load %arg4[%c0_7, %c0_8] : memref<8x128xf32, #tpu.memory_space<vmem>>, vector<8x128xf32>
    tpu.vector_store %arg4[%c0_7, %c0_8], %10 {strides = array<i32>} : memref<8x128xf32, #tpu.memory_space<vmem>>, vector<8x128xf32>,
    %c0_i32_9 = arith.constant 0 : i32
    %12 = arith.cmpi eq, %arg1, %c0_i32_9 : i32
    %13 = arith.extui %12 : i1 to i32
    %c0_i32_10 = arith.constant 0 : i32
    %14 = arith.cmpi ne, %13, %c0_i32_10 : i32
    scf.if %14 {
      %c0_11 = arith.constant 0 : index
      %c0_12 = arith.constant 0 : index
      %15 = vector.load %arg4[%c0_11, %c0_12] : memref<8x128xf32, #tpu.memory_space<vmem>>, vector<8x128xf32>
      %16 = arith.mulf %15, %15 : vector<8x128xf32>
      %cst_13 = arith.constant dense<0.000000e+00> : vector<8xf32>
      %17 = vector.multi_reduction <add>, %16, %cst_13 [1] : vector<8x128xf32> to vector<8xf32>
      %18 = vector.shape_cast %17 : vector<8xf32> to vector<8x1xf32>
      %cst_14 = arith.constant 9.99999996E-13 : f32
      %19 = vector.broadcast %cst_14 : f32 to vector<8x1xf32>
      %20 = arith.addf %18, %19 : vector<8x1xf32>
      %21 = math.rsqrt %20 : vector<8x1xf32>
      %22 = vector.broadcast %21 : vector<8x1xf32> to vector<8x128xf32>
      %23 = arith.mulf %15, %22 : vector<8x128xf32>
      %c0_15 = arith.constant 0 : index
      %c0_16 = arith.constant 0 : index
      %24 = vector.load %arg4[%c0_15, %c0_16] : memref<8x128xf32, #tpu.memory_space<vmem>>, vector<8x128xf32>
      tpu.vector_store %arg4[%c0_15, %c0_16], %23 {strides = array<i32>} : memref<8x128xf32, #tpu.memory_space<vmem>>, vector<8x128xf32>,
    } else {
    }
    return
  }
  func.func @transform_0(%arg0: i32, %arg1: i32) -> (i32, i32, i32) {
    %c0_i32 = arith.constant 0 : i32
    %c0_i32_0 = arith.constant 0 : i32
    return %arg0, %arg1, %c0_i32 : i32, i32, i32
  }
  func.func @transform_1(%arg0: i32, %arg1: i32) -> (i32, i32) {
    %c0_i32 = arith.constant 0 : i32
    return %arg0, %arg1 : i32, i32
  }
  func.func @transform_2(%arg0: i32, %arg1: i32) -> (i32, i32) {
    %c0_i32 = arith.constant 0 : i32
    %c0_i32_0 = arith.constant 0 : i32
    return %arg0, %c0_i32 : i32, i32
  }
}

</mosaic_0001>

<llo_original>
// kernel: tpu_custom_call.1
$region0: #{tpu_custom_call.1}
  #allocation0 [shape = 'u32[]', space=smem, size = 0x4, offset = 0x4, fixed_abs, tag = 'smem constant byte address 0x4 - core index']
  #allocation1 [shape = 'u32[72,128]{1,0:T(1,128)}', space=vmem, size = 0x9000, scoped, tag = 'internal scratch']
  %s0 = inlined_call_operand.hbm [shape: f32[8,16,128], index: 0, kind: input, shape index: {}]
  %s1 = inlined_call_operand.hbm [shape: s32[8,16], index: 1, kind: input, shape index: {}]
  %s2 = inlined_call_operand.hbm [shape: f32[8,128], index: 2, kind: output, shape index: {}]
  %s3 = sld [smem:[#allocation0]]
  $region34: #{tpu_custom_call.1} parent=0
    _
  %s5 = ssub.s32 1, %s3
  %s6 = scalar_select 0, %s5, %s3
  $region1: #{tpu_custom_call.1} parent=0
    #allocation2 [shape = 'u8[65536]{0}', space=vmem, size = 0x10000, scoped, tag = 'input window, operand 0, single buffered']
    #allocation3 [shape = 's32[1]{0}', space=sflag, size = 0x4, scoped, tag = 'scoped memory for tpu_custom_call.1']
    #allocation4 [shape = 's32[1]{0}', space=sflag, size = 0x4, scoped, tag = 'scoped memory for tpu_custom_call.1']
    #allocation5 [shape = 'u8[4096]{0}', space=vmem, size = 0x1000, scoped, tag = 'input window, operand 1, single buffered']
    #allocation6 [shape = 's32[1]{0}', space=sflag, size = 0x4, scoped, tag = 'scoped memory for tpu_custom_call.1']
    #allocation7 [shape = 'u8[4096]{0}', space=vmem, size = 0x1000, scoped, tag = 'output window, operand 0, single buffered']
    %7 = vsyncpa [#allocation3], 0
    %8 = vsyncpa [#allocation6], 0
    %9 = vsyncpa [#allocation4], 0
    // Predicated region
    $region2: #{tpu_custom_call.1} parent=1 // pred_check
      _
    $region3: #{tpu_custom_call.1} parent=1 // pred_check_branch
      %11 = sbr.rel (0) target = $region5
    $region4: #{tpu_custom_call.1} parent=1 // pred_region
      %13 = vsyncadd [#allocation3], 0
      %s14 = sshll.u32 %s0, 4
      %s15 = int_to_ptr.hbm [resolvable:$true] %s14
      %s16 = sshll.u32 [#allocation2], 4
      %s17 = int_to_ptr.vmem [resolvable:$true] %s16
      %22 = dma.hbm_to_vmem [thread:$0]  %s15, 2048, %s17, [#allocation3], 128, 128, 8
    $region5: #{tpu_custom_call.1} parent=1 // pred_fallthru
      _
    // Predicated region
    $region6: #{tpu_custom_call.1} parent=1 // pred_check
      _
    $region7: #{tpu_custom_call.1} parent=1 // pred_check_branch
      %24 = sbr.rel (0) target = $region9
    $region8: #{tpu_custom_call.1} parent=1 // pred_region
      %26 = vsyncadd [#allocation6], 0
      %s28 = sshll.u32 %s1, 4
      %s29 = int_to_ptr.hbm [resolvable:$true] %s28
      %s30 = sshll.u32 [#allocation5], 4
      %s31 = int_to_ptr.vmem [resolvable:$true] %s30
      %33 = dma.hbm_to_vmem [thread:$0]  %s29, 128, %s31, [#allocation6]
    $region9: #{tpu_custom_call.1} parent=1 // pred_fallthru
      _
    // Predicated region
    $region10: #{tpu_custom_call.1} parent=1 // pred_check
      _
    $region11: #{tpu_custom_call.1} parent=1 // pred_check_branch
      %35 = sbr.rel (0) target = $region13
    $region12: #{tpu_custom_call.1} parent=1 // pred_region
      %37 = dma.done [#allocation3], 2048
    $region13: #{tpu_custom_call.1} parent=1 // pred_fallthru
      _
    // Predicated region
    $region14: #{tpu_custom_call.1} parent=1 // pred_check
      _
    $region15: #{tpu_custom_call.1} parent=1 // pred_check_branch
      %39 = sbr.rel (0) target = $region17
    $region16: #{tpu_custom_call.1} parent=1 // pred_region
      %41 = dma.done [#allocation6], 128
    $region17: #{tpu_custom_call.1} parent=1 // pred_fallthru
      _
    %p42 = scmp.eq.s32.totalorder 0, 0
    // Predicated region
    $region18: #{tpu_custom_call.1} parent=1 // pred_check
      %p43 = pneg %p42
    $region19: #{tpu_custom_call.1} parent=1 // pred_check_branch
      %45 = sbr.rel (%p43) target = $region21
    $region20: #{tpu_custom_call.1} parent=1 // pred_region
      %46 = vst [vmem:[#allocation7] sm:$0xff] 0.0
    $region21: #{tpu_custom_call.1} parent=1 // pred_fallthru
      _
    %v47 = vld [vmem:[#allocation2] sm:$0xff]
    %v48 = vld [vmem:[#allocation2 + $0x8] sm:$0xff]
    %v49 = vld [vmem:[#allocation2 + $0x10] sm:$0xff]
    %v50 = vld [vmem:[#allocation2 + $0x18] sm:$0xff]
    %v51 = vld [vmem:[#allocation2 + $0x20] sm:$0xff]
    %v52 = vld [vmem:[#allocation2 + $0x28] sm:$0xff]
    %v53 = vld [vmem:[#allocation2 + $0x30] sm:$0xff]
    %v54 = vld [vmem:[#allocation2 + $0x38] sm:$0xff]
    %v55 = vld [vmem:[#allocation2 + $0x40] sm:$0xff]
    %v56 = vld [vmem:[#allocation2 + $0x48] sm:$0xff]
    %v57 = vld [vmem:[#allocation2 + $0x50] sm:$0xff]
    %v58 = vld [vmem:[#allocation2 + $0x58] sm:$0xff]
    %v59 = vld [vmem:[#allocation2 + $0x60] sm:$0xff]
    %v60 = vld [vmem:[#allocation2 + $0x68] sm:$0xff]
    %v61 = vld [vmem:[#allocation2 + $0x70] sm:$0xff]
    %v62 = vld [vmem:[#allocation2 + $0x78] sm:$0xff]
    %v63 = vld [vmem:[#allocation5] sm:$0xff]
    %v64 = vcvt.s32.f32 %v63
    %v66 = vrot.slane %v64, 1
    %v67 = vrot.slane %v64, 2
    %v68 = vrot.slane %v64, 3
    %v69 = vrot.slane %v64, 4
    %v70 = vrot.slane %v64, 5
    %v71 = vrot.slane %v64, 6
    %v72 = vrot.slane %v64, 7
    %vm73 = vcmask 130048
    %v74 = vsel %vm73, %v64, 0
    %76 = vmatpush.msra.mxu0 0.0
    %77 = vmatpush.msra.mxu0 0.0
    %78 = vmatpush.msra.mxu0 0.0
    %79 = vmatpush.msra.mxu0 0.0
    %80 = vmatpush.msra.mxu0 0.0
    %81 = vmatpush.msra.mxu0 0.0
    %82 = vmatpush.msra.mxu0 0.0
    %83 = vmatpush.msra.mxu0 0.0
    %84 = vmatpush.msra.mxu0 0.0
    %85 = vmatpush.msra.mxu0 0.0
    %86 = vmatpush.msra.mxu0 0.0
    %87 = vmatpush.msra.mxu0 0.0
    %88 = vmatpush.msra.mxu0 0.0
    %89 = vmatpush.msra.mxu0 0.0
    %90 = vmatpush.msra.mxu0 %v48
    %91 = vmatpush.msra.mxu0 %v47
    %92 = vmatmul.f32.gmra.mxu0 %v74
    %v93 = vpop.f32.mrf.mxu0
    %v94 = vadd.f32 0.0, %v93
    %95 = vdwg.mxu0
    %v96 = vsel %vm73, %v66, 0
    %98 = vmatpush.msra.mxu0 0.0
    %99 = vmatpush.msra.mxu0 0.0
    %100 = vmatpush.msra.mxu0 0.0
    %101 = vmatpush.msra.mxu0 0.0
    %102 = vmatpush.msra.mxu0 0.0
    %103 = vmatpush.msra.mxu0 0.0
    %104 = vmatpush.msra.mxu0 0.0
    %105 = vmatpush.msra.mxu0 0.0
    %106 = vmatpush.msra.mxu0 0.0
    %107 = vmatpush.msra.mxu0 0.0
    %108 = vmatpush.msra.mxu0 0.0
    %109 = vmatpush.msra.mxu0 0.0
    %110 = vmatpush.msra.mxu0 0.0
    %111 = vmatpush.msra.mxu0 0.0
    %112 = vmatpush.msra.mxu0 %v50
    %113 = vmatpush.msra.mxu0 %v49
    %114 = vmatmul.f32.gmra.mxu0 %v96
    %v115 = vpop.f32.mrf.mxu0
    %v116 = vadd.f32 0.0, %v115
    %117 = vdwg.mxu0
    %v118 = vsel %vm73, %v67, 0
    %120 = vmatpush.msra.mxu0 0.0
    %121 = vmatpush.msra.mxu0 0.0
    %122 = vmatpush.msra.mxu0 0.0
    %123 = vmatpush.msra.mxu0 0.0
    %124 = vmatpush.msra.mxu0 0.0
    %125 = vmatpush.msra.mxu0 0.0
    %126 = vmatpush.msra.mxu0 0.0
    %127 = vmatpush.msra.mxu0 0.0
    %128 = vmatpush.msra.mxu0 0.0
    %129 = vmatpush.msra.mxu0 0.0
    %130 = vmatpush.msra.mxu0 0.0
    %131 = vmatpush.msra.mxu0 0.0
    %132 = vmatpush.msra.mxu0 0.0
    %133 = vmatpush.msra.mxu0 0.0
    %134 = vmatpush.msra.mxu0 %v52
    %135 = vmatpush.msra.mxu0 %v51
    %136 = vmatmul.f32.gmra.mxu0 %v118
    %v137 = vpop.f32.mrf.mxu0
    %v138 = vadd.f32 0.0, %v137
    %139 = vdwg.mxu0
    %v140 = vsel %vm73, %v68, 0
    %142 = vmatpush.msra.mxu0 0.0
    %143 = vmatpush.msra.mxu0 0.0
    %144 = vmatpush.msra.mxu0 0.0
    %145 = vmatpush.msra.mxu0 0.0
    %146 = vmatpush.msra.mxu0 0.0
    %147 = vmatpush.msra.mxu0 0.0
    %148 = vmatpush.msra.mxu0 0.0
    %149 = vmatpush.msra.mxu0 0.0
    %150 = vmatpush.msra.mxu0 0.0
    %151 = vmatpush.msra.mxu0 0.0
    %152 = vmatpush.msra.mxu0 0.0
    %153 = vmatpush.msra.mxu0 0.0
    %154 = vmatpush.msra.mxu0 0.0
    %155 = vmatpush.msra.mxu0 0.0
    %156 = vmatpush.msra.mxu0 %v54
    %157 = vmatpush.msra.mxu0 %v53
    %158 = vmatmul.f32.gmra.mxu0 %v140
    %v159 = vpop.f32.mrf.mxu0
    %v160 = vadd.f32 0.0, %v159
    %161 = vdwg.mxu0
    %v162 = vsel %vm73, %v69, 0
    %164 = vmatpush.msra.mxu0 0.0
    %165 = vmatpush.msra.mxu0 0.0
    %166 = vmatpush.msra.mxu0 0.0
    %167 = vmatpush.msra.mxu0 0.0
    %168 = vmatpush.msra.mxu0 0.0
    %169 = vmatpush.msra.mxu0 0.0
    %170 = vmatpush.msra.mxu0 0.0
    %171 = vmatpush.msra.mxu0 0.0
    %172 = vmatpush.msra.mxu0 0.0
    %173 = vmatpush.msra.mxu0 0.0
    %174 = vmatpush.msra.mxu0 0.0
    %175 = vmatpush.msra.mxu0 0.0
    %176 = vmatpush.msra.mxu0 0.0
    %177 = vmatpush.msra.mxu0 0.0
    %178 = vmatpush.msra.mxu0 %v56
    %179 = vmatpush.msra.mxu0 %v55
    %180 = vmatmul.f32.gmra.mxu0 %v162
    %v181 = vpop.f32.mrf.mxu0
    %v182 = vadd.f32 0.0, %v181
    %183 = vdwg.mxu0
    %v184 = vsel %vm73, %v70, 0
    %186 = vmatpush.msra.mxu0 0.0
    %187 = vmatpush.msra.mxu0 0.0
    %188 = vmatpush.msra.mxu0 0.0
    %189 = vmatpush.msra.mxu0 0.0
    %190 = vmatpush.msra.mxu0 0.0
    %191 = vmatpush.msra.mxu0 0.0
    %192 = vmatpush.msra.mxu0 0.0
    %193 = vmatpush.msra.mxu0 0.0
    %194 = vmatpush.msra.mxu0 0.0
    %195 = vmatpush.msra.mxu0 0.0
    %196 = vmatpush.msra.mxu0 0.0
    %197 = vmatpush.msra.mxu0 0.0
    %198 = vmatpush.msra.mxu0 0.0
    %199 = vmatpush.msra.mxu0 0.0
    %200 = vmatpush.msra.mxu0 %v58
    %201 = vmatpush.msra.mxu0 %v57
    %202 = vmatmul.f32.gmra.mxu0 %v184
    %v203 = vpop.f32.mrf.mxu0
    %v204 = vadd.f32 0.0, %v203
    %205 = vdwg.mxu0
    %v206 = vsel %vm73, %v71, 0
    %208 = vmatpush.msra.mxu0 0.0
    %209 = vmatpush.msra.mxu0 0.0
    %210 = vmatpush.msra.mxu0 0.0
    %211 = vmatpush.msra.mxu0 0.0
    %212 = vmatpush.msra.mxu0 0.0
    %213 = vmatpush.msra.mxu0 0.0
    %214 = vmatpush.msra.mxu0 0.0
    %215 = vmatpush.msra.mxu0 0.0
    %216 = vmatpush.msra.mxu0 0.0
    %217 = vmatpush.msra.mxu0 0.0
    %218 = vmatpush.msra.mxu0 0.0
    %219 = vmatpush.msra.mxu0 0.0
    %220 = vmatpush.msra.mxu0 0.0
    %221 = vmatpush.msra.mxu0 0.0
    %222 = vmatpush.msra.mxu0 %v60
    %223 = vmatpush.msra.mxu0 %v59
    %224 = vmatmul.f32.gmra.mxu0 %v206
    %v225 = vpop.f32.mrf.mxu0
    %v226 = vadd.f32 0.0, %v225
    %227 = vdwg.mxu0
    %v228 = vsel %vm73, %v72, 0
    %230 = vmatpush.msra.mxu0 0.0
    %231 = vmatpush.msra.mxu0 0.0
    %232 = vmatpush.msra.mxu0 0.0
    %233 = vmatpush.msra.mxu0 0.0
    %234 = vmatpush.msra.mxu0 0.0
    %235 = vmatpush.msra.mxu0 0.0
    %236 = vmatpush.msra.mxu0 0.0
    %237 = vmatpush.msra.mxu0 0.0
    %238 = vmatpush.msra.mxu0 0.0
    %239 = vmatpush.msra.mxu0 0.0
    %240 = vmatpush.msra.mxu0 0.0
    %241 = vmatpush.msra.mxu0 0.0
    %242 = vmatpush.msra.mxu0 0.0
    %243 = vmatpush.msra.mxu0 0.0
    %244 = vmatpush.msra.mxu0 %v62
    %245 = vmatpush.msra.mxu0 %v61
    %246 = vmatmul.f32.gmra.mxu0 %v228
    %v247 = vpop.f32.mrf.mxu0
    %v248 = vadd.f32 0.0, %v247
    %249 = vdwg.mxu0
    %v250 = vld [vmem:[#allocation7] sm:$0xff]
    %v259 = vrot.slane %v116, 7
    %vm260 = vcmask 1041409
    %v261 = vsel %vm260, %v259, %v94
    %v262 = vrot.slane %v138, 6
    %vm263 = vcmask 1042434
    %v264 = vsel %vm263, %v262, %v261
    %v265 = vrot.slane %v160, 5
    %vm266 = vcmask 1043459
    %v267 = vsel %vm266, %v265, %v264
    %v268 = vrot.slane %v182, 4
    %vm269 = vcmask 1044484
    %v270 = vsel %vm269, %v268, %v267
    %v271 = vrot.slane %v204, 3
    %vm272 = vcmask 1045509
    %v273 = vsel %vm272, %v271, %v270
    %v274 = vrot.slane %v226, 2
    %vm275 = vcmask 1046534
    %v276 = vsel %vm275, %v274, %v273
    %v277 = vrot.slane %v248, 1
    %vm278 = vcmask 1047559
    %v279 = vsel %vm278, %v277, %v276
    %v281 = vadd.f32 %v250, %v279
    %282 = vst [vmem:[#allocation7] sm:$0xff] %v281
    // Predicated region
    $region22: #{tpu_custom_call.1} parent=1 // pred_check
      %p283 = pneg %p42
    $region23: #{tpu_custom_call.1} parent=1 // pred_check_branch
      %285 = sbr.rel (%p283) target = $region25
    $region24: #{tpu_custom_call.1} parent=1 // pred_region
      %v286 = vld [vmem:[#allocation7] sm:$0xff]
      %v287 = vmul.f32 %v286, %v286
      %288 = vadd.xlane.f32.xlu0 %v287
      %v289 = vpop.xlane.xlu0 %288
      %v290 = vadd.f32 %v289, 1e-12
      %v291 = vrsqrt.pop %v290
      %v292 = vmul.f32 %v291, %v290
      %v293 = vmul.f32 %v292, %v291
      %v294 = vmul.f32 0.5, %v293
      %v295 = vsub.f32 1.5, %v294
      %v296 = vmul.f32 %v291, %v295
      %vm297 = vweird.f32 %v290
      %vm298 = vweird.f32 %v291
      %vm299 = vmor %vm297, %vm298
      %v300 = vsel %vm299, %v291, %v296
      %v301 = vmul.f32 %v286, %v300
      %302 = vst [vmem:[#allocation7] sm:$0xff] %v301
    $region25: #{tpu_custom_call.1} parent=1 // pred_fallthru
      _
    // Predicated region
    $region26: #{tpu_custom_call.1} parent=1 // pred_check
      _
    $region27: #{tpu_custom_call.1} parent=1 // pred_check_branch
      %304 = sbr.rel (0) target = $region29
    $region28: #{tpu_custom_call.1} parent=1 // pred_region
      %306 = vsyncadd [#allocation4], 0
      %s308 = sshll.u32 [#allocation7], 4
      %s309 = int_to_ptr.vmem [resolvable:$true] %s308
      %s310 = sshll.u32 %s2, 4
      %s311 = int_to_ptr.hbm [resolvable:$true] %s310
      %313 = dma.vmem_to_hbm [thread:$0]  %s309, 128, %s311, [#allocation4]
    $region29: #{tpu_custom_call.1} parent=1 // pred_fallthru
      _
    // Predicated region
    $region30: #{tpu_custom_call.1} parent=1 // pred_check
      _
    $region31: #{tpu_custom_call.1} parent=1 // pred_check_branch
      %315 = sbr.rel (0) target = $region33
    $region32: #{tpu_custom_call.1} parent=1 // pred_region
      %317 = dma.done [#allocation4], 128
    $region33: #{tpu_custom_call.1} parent=1 // pred_fallthru
      _
    %318 = vsyncpa [#allocation3], 1
    %319 = vsyncpa [#allocation6], 1
    %320 = vsyncpa [#allocation4], 1

</llo_original>
